<compile_context>
chip_gen: v6e
topology: v6e:2x2x1
jax: 0.10.0
libtpu: 0.0.40
codegen_flags: <defaults>
</compile_context>

<pallas_src>
import functools

import jax
import jax.numpy as jnp
from jax.experimental import pallas as pl
from jax.experimental.pallas import tpu as pltpu

LANES = 128
SUBLANES = 8


def _cdiv(a, b):
    return -(-a // b)


def _round_up(a, b):
    return _cdiv(a, b) * b


def _num_core_splits():
    """#TensorCores to shard the stream over (2 on v7x, 1 on v5e/v6e).

    Best-effort query; 2 is always *correct* (on a 1-TC chip the second split
    is just a sequential pass plus at most one fully-masked duplicate step),
    so fall back to 2 on any failure.
    """
    try:
        info = pltpu.get_tpu_info()
        for attr in ("num_cores", "num_tensorcores", "tensorcore_count", "core_count"):
            n = getattr(info, attr, None)
            if n is not None:
                n = int(n)
                if n >= 1:
                    return max(1, min(n, 2))
    except Exception:
        pass
    return 2


def _bce_sum_kernel(x_ref, y_ref, o_ref, *, block_rows, tiles_per_split, rows):
    c = pl.program_id(0)          # core-split index ("parallel")
    t = pl.program_id(1)          # reduction step within the split ("arbitrary")

    # o_ref is the per-split (8,128) accumulator, resident across `t`.
    @pl.when(t == 0)
    def _():
        o_ref[...] = jnp.zeros_like(o_ref)

    x = x_ref[...].astype(jnp.float32)
    y = y_ref[...].astype(jnp.float32)

    # Numerically stable BCE-with-logits (elementwise; VPU + 2 EUP ops/elem).
    loss = jnp.maximum(x, 0.0) - x * y + jnp.log1p(jnp.exp(-jnp.abs(x)))

    # Logical (unclamped) tile index; the index_map clamps the *read* so
    # duplicate tiles stay in-bounds, but masking uses the logical index.
    tile_idx = c * tiles_per_split + t
    full_tile = (tile_idx + 1) * block_rows <= rows     # scalar condition

    @pl.when(full_tile)
    def _():
        # Steady-state fast path: every row of this tile is valid data.
        o_ref[...] += loss.reshape(block_rows // SUBLANES, SUBLANES, LANES).sum(axis=0)

    @pl.when(jnp.logical_not(full_tile))
    def _():
        # Partial last tile (unspecified trailing-block padding) or clamped
        # duplicate tile: mask rows beyond the valid prefix to exactly zero.
        grow = tile_idx * block_rows + jax.lax.broadcasted_iota(
            jnp.int32, loss.shape, 0)
        masked = jnp.where(grow < rows, loss, 0.0)
        o_ref[...] += masked.reshape(block_rows // SUBLANES, SUBLANES, LANES).sum(axis=0)


def bce_with_logits_loss_2d(output, target, *, block_rows=4096):
    """Mean BCE-with-logits over all elements (PyTorch BCEWithLogitsLoss2d)."""
    assert output.shape == target.shape
    n_valid = int(output.size)

    x = jnp.ravel(output)
    y = jnp.ravel(target)
    rows = n_valid // LANES                 # full 128-lane rows
    tail = n_valid - rows * LANES           # <=127 leftover elements

    total = jnp.float32(0.0)

    if rows > 0:
        if tail:
            # 128-aligned prefix only (offset-0 slice; NO full-array jnp.pad
            # copy). The tiny tail is handled with plain jnp below.
            xp = x[: rows * LANES]
            yp = y[: rows * LANES]
        else:
            xp, yp = x, y
        x2 = xp.reshape(rows, LANES)
        y2 = yp.reshape(rows, LANES)

        num_splits = _num_core_splits()

        # Row tile: large (amortizes per-grid-step overhead), multiple of 16 so
        # bf16 inputs keep their native (16,128) packing, capped for small inputs.
        block_rows = max(16, min(_round_up(block_rows, 16), _round_up(rows, 16)))
        tiles = _cdiv(rows, block_rows)
        tiles_per_split = _cdiv(tiles, num_splits)
        grid = (num_splits, tiles_per_split)

        def in_map(c, t):
            # Clamp so duplicate tiles (odd tile counts / tiny inputs) stay
            # in-bounds; their contribution is masked to zero in the kernel.
            return (jnp.minimum(c * tiles_per_split + t, tiles - 1), 0)

        tile_spec = pl.BlockSpec((block_rows, LANES), in_map)
        out_spec = pl.BlockSpec((SUBLANES, LANES), lambda c, t: (c, 0))

        kernel = functools.partial(
            _bce_sum_kernel,
            block_rows=block_rows,
            tiles_per_split=tiles_per_split,
            rows=rows,
        )

        # 2 inputs x 2 pipeline buffers + headroom; keep under v7x's 64 MiB
        # physical VMEM and above the small default scoped limits.
        itemsize = max(x2.dtype.itemsize, y2.dtype.itemsize)
        block_bytes = block_rows * LANES * itemsize
        vmem_limit = int(min(48 << 20, max(16 << 20, 6 * block_bytes)))

        partials = pl.pallas_call(
            kernel,
            out_shape=jax.ShapeDtypeStruct((num_splits * SUBLANES, LANES),
                                           jnp.float32),
            grid_spec=pltpu.PrefetchScalarGridSpec(
                num_scalar_prefetch=0,
                grid=grid,
                in_specs=[tile_spec, tile_spec],
                out_specs=out_spec,
            ),
            compiler_params=pltpu.CompilerParams(
                dimension_semantics=("parallel", "arbitrary"),
                vmem_limit_bytes=vmem_limit,
            ),
        )(x2, y2)

        total = total + jnp.sum(partials, dtype=jnp.float32)

    if tail:
        xt = x[rows * LANES:].astype(jnp.float32)
        yt = y[rows * LANES:].astype(jnp.float32)
        total = total + jnp.sum(
            jnp.maximum(xt, 0.0) - xt * yt + jnp.log1p(jnp.exp(-jnp.abs(xt))),
            dtype=jnp.float32)

    # reduction='mean'; computed in f32, returned in the input's floating
    # dtype (matches torch, which returns the loss in the input dtype).
    return (total / jnp.float32(n_valid)).astype(output.dtype)


if __name__ == "__main__":
    key = jax.random.PRNGKey(0)

    def ref_loss(o, tt):
        o32 = o.astype(jnp.float32)
        t32 = tt.astype(jnp.float32)
        return jnp.mean(jnp.maximum(o32, 0.0) - o32 * t32
                        + jnp.log1p(jnp.exp(-jnp.abs(o32))))

    # NCHW like the PyTorch module would receive.
    k1, k2 = jax.random.split(key)
    x = jax.random.normal(k1, (2, 4, 16, 16), dtype=jnp.float32)            # logits
    t = (jax.random.uniform(k2, (2, 4, 16, 16)) > 0.5).astype(jnp.float32)  # targets
    loss = bce_with_logits_loss_2d(x, t)
    jax.block_until_ready(loss)
    assert jnp.allclose(loss, ref_loss(x, t), rtol=1e-5, atol=1e-5), (loss, ref_loss(x, t))

    # Flat size not a multiple of 128: exercises the jnp tail path (no host pad).
    k3, k4 = jax.random.split(k1)
    x2 = jax.random.normal(k3, (2, 1049), dtype=jnp.float32)
    t2 = (jax.random.uniform(k4, (2, 1049)) > 0.5).astype(jnp.float32)
    loss2 = bce_with_logits_loss_2d(x2, t2)
    jax.block_until_ready(loss2)
    assert jnp.allclose(loss2, ref_loss(x2, t2), rtol=1e-5, atol=1e-5), (loss2, ref_loss(x2, t2))

    # Multi-tile accumulation across the "arbitrary" grid axis.
    k5, k6 = jax.random.split(k2)
    x3 = jax.random.normal(k5, (2, 4, 64, 64), dtype=jnp.float32)
    t3 = (jax.random.uniform(k6, (2, 4, 64, 64)) > 0.5).astype(jnp.float32)
    loss3 = bce_with_logits_loss_2d(x3, t3, block_rows=64)
    jax.block_until_ready(loss3)
    assert jnp.allclose(loss3, ref_loss(x3, t3), rtol=1e-5, atol=1e-5), (loss3, ref_loss(x3, t3))

    print("KERNEL_OK")
</pallas_src>

<mosaic_0001>
module attributes {stable_mosaic.version = 11 : i64} {
  func.func @_bce_sum_kernel(%arg0: i32, %arg1: i32, %arg2: memref<16x128xf32, #tpu.memory_space<vmem>>, %arg3: memref<16x128xf32, #tpu.memory_space<vmem>>, %arg4: memref<8x128xf32, #tpu.memory_space<vmem>>) attributes {dimension_semantics = [#tpu.dimension_semantics<parallel>, #tpu.dimension_semantics<arbitrary>], iteration_bounds = array<i64: 2, 1>, scalar_prefetch = 0 : i64, scratch_operands = 0 : i64, tpu.core_type = #tpu.core_type<tc>, window_params = [{transform_indices = @transform_0, window_bounds = array<i64: 16, 128>}, {transform_indices = @transform_1, window_bounds = array<i64: 16, 128>}, {transform_indices = @transform_2, window_bounds = array<i64: 8, 128>}]} {
    %c0_i32 = arith.constant 0 : i32
    %0 = arith.cmpi eq, %arg1, %c0_i32 : i32
    %1 = arith.extui %0 : i1 to i32
    %c0_i32_0 = arith.constant 0 : i32
    %2 = arith.cmpi ne, %1, %c0_i32_0 : i32
    scf.if %2 {
      %cst_9 = arith.constant 0.000000e+00 : f32
      %25 = vector.broadcast %cst_9 : f32 to vector<8x128xf32>
      %c0_10 = arith.constant 0 : index
      %c0_11 = arith.constant 0 : index
      %26 = vector.load %arg4[%c0_10, %c0_11] : memref<8x128xf32, #tpu.memory_space<vmem>>, vector<8x128xf32>
      tpu.vector_store %arg4[%c0_10, %c0_11], %25 {strides = array<i32>} : memref<8x128xf32, #tpu.memory_space<vmem>>, vector<8x128xf32>,
    } else {
    }
    %c0 = arith.constant 0 : index
    %c0_1 = arith.constant 0 : index
    %3 = vector.load %arg2[%c0, %c0_1] : memref<16x128xf32, #tpu.memory_space<vmem>>, vector<16x128xf32>
    %c0_2 = arith.constant 0 : index
    %c0_3 = arith.constant 0 : index
    %4 = vector.load %arg3[%c0_2, %c0_3] : memref<16x128xf32, #tpu.memory_space<vmem>>, vector<16x128xf32>
    %cst = arith.constant 0.000000e+00 : f32
    %5 = vector.broadcast %cst : f32 to vector<16x128xf32>
    %6 = arith.maximumf %3, %5 : vector<16x128xf32>
    %7 = arith.mulf %3, %4 : vector<16x128xf32>
    %8 = arith.subf %6, %7 : vector<16x128xf32>
    %9 = math.absf %3 : vector<16x128xf32>
    %cst_4 = arith.constant 0.000000e+00 : f32
    %10 = vector.broadcast %cst_4 : f32 to vector<16x128xf32>
    %11 = arith.subf %10, %9 : vector<16x128xf32>
    %12 = math.exp %11 : vector<16x128xf32>
    %13 = math.log1p %12 : vector<16x128xf32>
    %14 = arith.addf %8, %13 : vector<16x128xf32>
    %c1_i32 = arith.constant 1 : i32
    %15 = arith.muli %arg0, %c1_i32 : i32
    %16 = arith.addi %15, %arg1 : i32
    %c1_i32_5 = arith.constant 1 : i32
    %17 = arith.addi %16, %c1_i32_5 : i32
    %c16_i32 = arith.constant 16 : i32
    %18 = arith.muli %17, %c16_i32 : i32
    %c16_i32_6 = arith.constant 16 : i32
    %19 = arith.cmpi sle, %18, %c16_i32_6 : i32
    %20 = arith.extui %19 : i1 to i32
    %c0_i32_7 = arith.constant 0 : i32
    %21 = arith.cmpi ne, %20, %c0_i32_7 : i32
    scf.if %21 {
      %c0_9 = arith.constant 0 : index
      %c0_10 = arith.constant 0 : index
      %25 = vector.load %arg4[%c0_9, %c0_10] : memref<8x128xf32, #tpu.memory_space<vmem>>, vector<8x128xf32>
      %26 = vector.shape_cast %14 : vector<16x128xf32> to vector<2x8x128xf32>
      %cst_11 = arith.constant dense<0.000000e+00> : vector<8x128xf32>
      %27 = vector.multi_reduction <add>, %26, %cst_11 [0] : vector<2x8x128xf32> to vector<8x128xf32>
      %28 = arith.addf %25, %27 : vector<8x128xf32>
      %c0_12 = arith.constant 0 : index
      %c0_13 = arith.constant 0 : index
      %29 = vector.load %arg4[%c0_12, %c0_13] : memref<8x128xf32, #tpu.memory_space<vmem>>, vector<8x128xf32>
      tpu.vector_store %arg4[%c0_12, %c0_13], %28 {strides = array<i32>} : memref<8x128xf32, #tpu.memory_space<vmem>>, vector<8x128xf32>,
    } else {
    }
    %true = arith.constant true
    %22 = arith.xori %19, %true : i1
    %23 = arith.extui %22 : i1 to i32
    %c0_i32_8 = arith.constant 0 : i32
    %24 = arith.cmpi ne, %23, %c0_i32_8 : i32
    scf.if %24 {
      %c16_i32_9 = arith.constant 16 : i32
      %25 = arith.muli %16, %c16_i32_9 : i32
      %26 = tpu.iota {dimensions = array<i32: 0>} : vector<16x128xi32>
      %27 = vector.broadcast %25 : i32 to vector<16x128xi32>
      %28 = arith.addi %27, %26 : vector<16x128xi32>
      %c16_i32_10 = arith.constant 16 : i32
      %29 = vector.broadcast %c16_i32_10 : i32 to vector<16x128xi32>
      %30 = arith.cmpi slt, %28, %29 : vector<16x128xi32>
      %cst_11 = arith.constant 0.000000e+00 : f32
      %31 = vector.broadcast %cst_11 : f32 to vector<16x128xf32>
      %32 = arith.select %30, %14, %31 : vector<16x128xi1>, vector<16x128xf32>
      %c0_12 = arith.constant 0 : index
      %c0_13 = arith.constant 0 : index
      %33 = vector.load %arg4[%c0_12, %c0_13] : memref<8x128xf32, #tpu.memory_space<vmem>>, vector<8x128xf32>
      %34 = vector.shape_cast %32 : vector<16x128xf32> to vector<2x8x128xf32>
      %cst_14 = arith.constant dense<0.000000e+00> : vector<8x128xf32>
      %35 = vector.multi_reduction <add>, %34, %cst_14 [0] : vector<2x8x128xf32> to vector<8x128xf32>
      %36 = arith.addf %33, %35 : vector<8x128xf32>
      %c0_15 = arith.constant 0 : index
      %c0_16 = arith.constant 0 : index
      %37 = vector.load %arg4[%c0_15, %c0_16] : memref<8x128xf32, #tpu.memory_space<vmem>>, vector<8x128xf32>
      tpu.vector_store %arg4[%c0_15, %c0_16], %36 {strides = array<i32>} : memref<8x128xf32, #tpu.memory_space<vmem>>, vector<8x128xf32>,
    } else {
    }
    return
  }
  func.func @transform_0(%arg0: i32, %arg1: i32) -> (i32, i32) {
    %c1_i32 = arith.constant 1 : i32
    %0 = arith.muli %arg0, %c1_i32 : i32
    %1 = arith.addi %0, %arg1 : i32
    %c0_i32 = arith.constant 0 : i32
    %2 = arith.minsi %1, %c0_i32 : i32
    %c0_i32_0 = arith.constant 0 : i32
    %c0_i32_1 = arith.constant 0 : i32
    return %2, %c0_i32_0 : i32, i32
  }
  func.func @transform_1(%arg0: i32, %arg1: i32) -> (i32, i32) {
    %c1_i32 = arith.constant 1 : i32
    %0 = arith.muli %arg0, %c1_i32 : i32
    %1 = arith.addi %0, %arg1 : i32
    %c0_i32 = arith.constant 0 : i32
    %2 = arith.minsi %1, %c0_i32 : i32
    %c0_i32_0 = arith.constant 0 : i32
    %c0_i32_1 = arith.constant 0 : i32
    return %2, %c0_i32_0 : i32, i32
  }
  func.func @transform_2(%arg0: i32, %arg1: i32) -> (i32, i32) {
    %c0_i32 = arith.constant 0 : i32
    %c0_i32_0 = arith.constant 0 : i32
    return %arg0, %c0_i32 : i32, i32
  }
}

</mosaic_0001>

<llo_original>
// kernel: tpu_custom_call.1
$region0: #{tpu_custom_call.1}
  #allocation0 [shape = 'u32[]', space=smem, size = 0x4, offset = 0x4, fixed_abs, tag = 'smem constant byte address 0x4 - core index']
  #allocation1 [shape = 'u32[144,128]{1,0:T(1,128)}', space=vmem, size = 0x12000, scoped, tag = 'internal scratch']
  %s0 = inlined_call_operand.hbm [shape: f32[16,128], index: 0, kind: input, shape index: {}]
  %s1 = inlined_call_operand.hbm [shape: f32[16,128], index: 1, kind: input, shape index: {}]
  %s2 = inlined_call_operand.hbm [shape: f32[16,128], index: 2, kind: output, shape index: {}]
  %s3 = sld [smem:[#allocation0]]
  $region61: #{tpu_custom_call.1} parent=0
    _
  %s5 = ssub.s32 1, %s3
  %s6 = scalar_select 0, %s5, %s3
  $region1: #{tpu_custom_call.1} parent=0
    #allocation2 [shape = 'u8[16384]{0}', space=vmem, size = 0x4000, scoped, tag = 'input window, operand 0']
    #allocation3 [shape = 's32[2]{0}', space=sflag, size = 0x8, scoped, tag = 'scoped memory for tpu_custom_call.1']
    #allocation4 [shape = 's32[2]{0}', space=sflag, size = 0x8, scoped, tag = 'scoped memory for tpu_custom_call.1']
    #allocation5 [shape = 'u8[16384]{0}', space=vmem, size = 0x4000, scoped, tag = 'input window, operand 1']
    #allocation6 [shape = 's32[2]{0}', space=sflag, size = 0x8, scoped, tag = 'scoped memory for tpu_custom_call.1']
    #allocation7 [shape = 'u8[8192]{0}', space=vmem, size = 0x2000, scoped, tag = 'output window, operand 0']
    %7 = vsyncpa [#allocation3], 0
    %s8 = scalar_lea.sflag [#allocation3], 1
    %9 = vsyncpa %s8, 0
    %10 = vsyncpa [#allocation6], 0
    %s11 = scalar_lea.sflag [#allocation6], 1
    %12 = vsyncpa %s11, 0
    %13 = vsyncpa [#allocation4], 0
    %s14 = scalar_lea.sflag [#allocation4], 1
    %15 = vsyncpa %s14, 0
    loop: start=0, step=1, limit=4
    $region2: #{tpu_custom_call.1} parent=1 // loop_pre_header
      _
    $region3: #{tpu_custom_call.1} parent=1 // loop_header
      %s17 = sphi 0, %s21
      %p18 = scmp.ge.s32.totalorder %s17, 4
      %s24 = sphi 0, %s36
      %s25 = sphi 0, %s32
      %s26 = sphi 0, %s24
      %s27 = sphi 0, %s25
      %s28 = sphi 0, %s26
      %s29 = sphi 0, %s27
      %s45 = sphi 0, %s47
      %s48 = sphi 0, %s45
      %s49 = sphi 0, %s48
      %s65 = sphi 0, %s49
      %s77 = sphi 0, %s79
      %s80 = sphi 0, %s77
      %s81 = sphi 0, %s80
      %s97 = sphi 0, %s81
      %s103 = sphi 0, %s105
      %s106 = sphi 0, %s103
      %s107 = sphi 0, %s106
      %s123 = sphi 0, %s107
    $region4: #{tpu_custom_call.1} parent=1 // loop_header_branch
      %20 = sbr.rel (%p18) target = $region8
    $region5: #{tpu_custom_call.1} parent=1 // loop_body
      %s22 = ssub.s32 %s17, 1
      %s23 = ssub.s32 %s17, 2
      %s30 = sadd.s32 1, %s25
      %p31 = scmp.ge.s32.totalorder %s30, 1
      %s32 = scalar_select %p31, 0, %s30
      %s33 = sadd.s32 1, %s24
      %s34 = scalar_select %p31, %s33, %s24
      %p35 = scmp.ge.s32.totalorder %s34, 2
      %s36 = scalar_select %p35, 0, %s34
      %s37 = sadd.s32 %s24, %s25
      %p38 = scmp.lt.s32.totalorder %s37, 0
      %s39 = scalar_select %p38, %s37, 0
      %s40 = sadd.s32 %s36, %s32
      %p41 = scmp.lt.s32.totalorder %s40, 0
      %s42 = scalar_select %p41, %s40, 0
      %s43 = ssub.s32 %s39, %s42
      %p44 = scmp.eq.s32.totalorder %s43, 0
      %s46 = sadd.s32 %s45, 1
      %s47 = scalar_select %p44, %s45, %s46
      %p50 = pneg %p44
      %p51 = scmp.eq.s32.totalorder %s17, 1
      %p52 = por %p50, %p51
      %p53 = scmp.ne.s32.totalorder %s45, %s48
      %p54 = scmp.eq.s32.totalorder %s17, 0
      %p55 = por %p53, %p54
      %p56 = scmp.ne.s32.totalorder %s45, %s48
      %p57 = scmp.eq.s32.totalorder %s22, 1
      %p58 = por %p56, %p57
      %p59 = scmp.ne.s32.totalorder %s48, %s49
      %p60 = scmp.eq.s32.totalorder %s22, 0
      %p61 = por %p59, %p60
      %p62 = scmp.ne.s32.totalorder %s48, %s49
      %p63 = scmp.eq.s32.totalorder %s23, 1
      %p64 = por %p62, %p63
      %p66 = scmp.ne.s32.totalorder %s49, %s65
      %p67 = scmp.eq.s32.totalorder %s23, 0
      %p68 = por %p66, %p67
      %s69 = sadd.s32 %s24, %s25
      %p70 = scmp.lt.s32.totalorder %s69, 0
      %s71 = scalar_select %p70, %s69, 0
      %s72 = sadd.s32 %s36, %s32
      %p73 = scmp.lt.s32.totalorder %s72, 0
      %s74 = scalar_select %p73, %s72, 0
      %s75 = ssub.s32 %s71, %s74
      %p76 = scmp.eq.s32.totalorder %s75, 0
      %s78 = sadd.s32 %s77, 1
      %s79 = scalar_select %p76, %s77, %s78
      %p82 = pneg %p76
      %p83 = scmp.eq.s32.totalorder %s17, 1
      %p84 = por %p82, %p83
      %p85 = scmp.ne.s32.totalorder %s77, %s80
      %p86 = scmp.eq.s32.totalorder %s17, 0
      %p87 = por %p85, %p86
      %p88 = scmp.ne.s32.totalorder %s77, %s80
      %p89 = scmp.eq.s32.totalorder %s22, 1
      %p90 = por %p88, %p89
      %p91 = scmp.ne.s32.totalorder %s80, %s81
      %p92 = scmp.eq.s32.totalorder %s22, 0
      %p93 = por %p91, %p92
      %p94 = scmp.ne.s32.totalorder %s80, %s81
      %p95 = scmp.eq.s32.totalorder %s23, 1
      %p96 = por %p94, %p95
      %p98 = scmp.ne.s32.totalorder %s81, %s97
      %p99 = scmp.eq.s32.totalorder %s23, 0
      %p100 = por %p98, %p99
      %s101 = ssub.s32 %s24, %s36
      %p102 = scmp.eq.s32.totalorder %s101, 0
      %s104 = sadd.s32 %s103, 1
      %s105 = scalar_select %p102, %s103, %s104
      %p108 = pneg %p102
      %p109 = scmp.eq.s32.totalorder %s17, 1
      %p110 = por %p108, %p109
      %p111 = scmp.ne.s32.totalorder %s103, %s106
      %p112 = scmp.eq.s32.totalorder %s17, 0
      %p113 = por %p111, %p112
      %p114 = scmp.ne.s32.totalorder %s103, %s106
      %p115 = scmp.eq.s32.totalorder %s22, 1
      %p116 = por %p114, %p115
      %p117 = scmp.ne.s32.totalorder %s106, %s107
      %p118 = scmp.eq.s32.totalorder %s22, 0
      %p119 = por %p117, %p118
      %p120 = scmp.ne.s32.totalorder %s106, %s107
      %p121 = scmp.eq.s32.totalorder %s23, 1
      %p122 = por %p120, %p121
      %p124 = scmp.ne.s32.totalorder %s107, %s123
      %p125 = scmp.eq.s32.totalorder %s23, 0
      %p126 = por %p124, %p125
      %p127 = scmp.le.s32.totalorder 1, %s17
      %p128 = scmp.lt.s32.totalorder %s17, 3
      %p129 = pnand %p127, %p128
      %p130 = pneg %p129
      // Predicated region
      $region9: #{tpu_custom_call.1} parent=5 // pred_check
        _
      $region10: #{tpu_custom_call.1} parent=5 // pred_check_branch
        %132 = sbr.rel (%p129) target = $region12
      $region11: #{tpu_custom_call.1} parent=5 // pred_region
        %s133 = ssub.s32 %s17, 1
      $region12: #{tpu_custom_call.1} parent=5 // pred_fallthru
        _
      %p134 = scmp.lt.s32.totalorder %s17, 2
      // Predicated region
      $region13: #{tpu_custom_call.1} parent=5 // pred_check
        %p135 = pneg %p134
      $region14: #{tpu_custom_call.1} parent=5 // pred_check_branch
        %137 = sbr.rel (%p135) target = $region16
      $region15: #{tpu_custom_call.1} parent=5 // pred_region
        // Predicated region
        $region17: #{tpu_custom_call.1} parent=15 // pred_check
          %p138 = pneg %p55
        $region18: #{tpu_custom_call.1} parent=15 // pred_check_branch
          %140 = sbr.rel (%p138) target = $region20
        $region19: #{tpu_custom_call.1} parent=15 // pred_region
          %s141 = sand.u32 %s45, 1
          %s142 = scalar_lea.sflag [#allocation3], %s141
          %s143 = sand.u32 %s45, 1
          %s144 = smul.addr %s143, 16
          %s145 = scalar_lea.vmem [#allocation2], %s144
          %s146 = sadd.s32 %s24, %s25
          %p147 = scmp.lt.s32.totalorder %s146, 0
          %s148 = scalar_select %p147, %s146, 0
          %s149 = smul.u32 2, %s148
          %s151 = ssub.s32 256, 256
          %152 = vsyncadd %s142, %s151
          %s153 = smul.addr %s149, 128
          %s154 = scalar_lea.hbm %s0, %s153
          %s155 = sshll.u32 %s145, 4
          %s156 = int_to_ptr.vmem [resolvable:$true] %s155
          %161 = dma.hbm_to_vmem [thread:$0]  %s154, 256, %s156, %s142, 128, 128, 8
        $region20: #{tpu_custom_call.1} parent=15 // pred_fallthru
          _
        // Predicated region
        $region21: #{tpu_custom_call.1} parent=15 // pred_check
          %p162 = pneg %p87
        $region22: #{tpu_custom_call.1} parent=15 // pred_check_branch
          %164 = sbr.rel (%p162) target = $region24
        $region23: #{tpu_custom_call.1} parent=15 // pred_region
          %s165 = sand.u32 %s77, 1
          %s166 = scalar_lea.sflag [#allocation6], %s165
          %s167 = sand.u32 %s77, 1
          %s168 = smul.addr %s167, 16
          %s169 = scalar_lea.vmem [#allocation5], %s168
          %s170 = sadd.s32 %s24, %s25
          %p171 = scmp.lt.s32.totalorder %s170, 0
          %s172 = scalar_select %p171, %s170, 0
          %s173 = smul.u32 2, %s172
          %s175 = ssub.s32 256, 256
          %176 = vsyncadd %s166, %s175
          %s177 = smul.addr %s173, 128
          %s178 = scalar_lea.hbm %s1, %s177
          %s179 = sshll.u32 %s169, 4
          %s180 = int_to_ptr.vmem [resolvable:$true] %s179
          %185 = dma.hbm_to_vmem [thread:$0]  %s178, 256, %s180, %s166, 128, 128, 8
        $region24: #{tpu_custom_call.1} parent=15 // pred_fallthru
          _
      $region16: #{tpu_custom_call.1} parent=5 // pred_fallthru
        _
      %p186 = scmp.le.s32.totalorder 1, %s17
      %p187 = scmp.lt.s32.totalorder %s17, 3
      %p188 = pnand %p186, %p187
      %p189 = pneg %p188
      // Predicated region
      $region25: #{tpu_custom_call.1} parent=5 // pred_check
        _
      $region26: #{tpu_custom_call.1} parent=5 // pred_check_branch
        %191 = sbr.rel (%p188) target = $region28
      $region27: #{tpu_custom_call.1} parent=5 // pred_region
        %s192 = ssub.s32 %s17, 1
        %s193 = sand.u32 %s48, 1
        %s194 = scalar_lea.sflag [#allocation3], %s193
        %s195 = sand.u32 %s48, 1
        %s196 = smul.addr %s195, 16
        %s197 = scalar_lea.vmem [#allocation2], %s196
        // Predicated region
        $region29: #{tpu_custom_call.1} parent=27 // pred_check
          %p198 = pneg %p61
        $region30: #{tpu_custom_call.1} parent=27 // pred_check_branch
          %200 = sbr.rel (%p198) target = $region32
        $region31: #{tpu_custom_call.1} parent=27 // pred_region
          %201 = dma.done %s194, 256
        $region32: #{tpu_custom_call.1} parent=27 // pred_fallthru
          _
        %s202 = sand.u32 %s80, 1
        %s203 = scalar_lea.sflag [#allocation6], %s202
        %s204 = sand.u32 %s80, 1
        %s205 = smul.addr %s204, 16
        %s206 = scalar_lea.vmem [#allocation5], %s205
        // Predicated region
        $region33: #{tpu_custom_call.1} parent=27 // pred_check
          %p207 = pneg %p93
        $region34: #{tpu_custom_call.1} parent=27 // pred_check_branch
          %209 = sbr.rel (%p207) target = $region36
        $region35: #{tpu_custom_call.1} parent=27 // pred_region
          %210 = dma.done %s203, 256
        $region36: #{tpu_custom_call.1} parent=27 // pred_fallthru
          _
        %s211 = sand.u32 %s48, 1
        %s212 = scalar_lea.sflag [#allocation3], %s211
        %s213 = sand.u32 %s48, 1
        %s214 = smul.addr %s213, 16
        %s215 = scalar_lea.vmem [#allocation2], %s214
        %p216 = pneg %p61
        %p217 = pneg %p58
        %s218 = sand.u32 %s80, 1
        %s219 = scalar_lea.sflag [#allocation6], %s218
        %s220 = sand.u32 %s80, 1
        %s221 = smul.addr %s220, 16
        %s222 = scalar_lea.vmem [#allocation5], %s221
        %p223 = pneg %p93
        %p224 = pneg %p90
        %p225 = pneg %p119
        %p226 = pneg %p116
        %s227 = sand.u32 %s106, 1
        %s228 = scalar_lea.sflag [#allocation4], %s227
        %s229 = sand.u32 %s106, 1
        %s230 = smul.addr %s229, 8
        %s231 = scalar_lea.vmem [#allocation7], %s230
        %s232 = sadd.s32 %s26, %s27
        %p233 = scmp.lt.s32.totalorder %s232, 0
        %s234 = scalar_select %p233, %s232, 0
        %s235 = smul.u32 2, %s234
        %s236 = sadd.s32 %s26, %s27
        %p237 = scmp.lt.s32.totalorder %s236, 0
        %s238 = scalar_select %p237, %s236, 0
        %s239 = smul.u32 2, %s238
        %p240 = scmp.eq.s32.totalorder %s27, 0
        // Predicated region
        $region37: #{tpu_custom_call.1} parent=27 // pred_check
          %p241 = pneg %p240
        $region38: #{tpu_custom_call.1} parent=27 // pred_check_branch
          %243 = sbr.rel (%p241) target = $region40
        $region39: #{tpu_custom_call.1} parent=27 // pred_region
          %244 = vst [vmem:[%s231] sm:$0xff] 0.0
        $region40: #{tpu_custom_call.1} parent=27 // pred_fallthru
          _
        %v245 = vld [vmem:[%s197] sm:$0xff]
        %v246 = vld [vmem:[%s197 + $0x8] sm:$0xff]
        %v247 = vld [vmem:[%s206] sm:$0xff]
        %v248 = vld [vmem:[%s206 + $0x8] sm:$0xff]
        %v249 = vmax.f32 %v245, 0.0
        %v250 = vmax.f32 %v246, 0.0
        %v251 = vmul.f32 %v245, %v247
        %v252 = vmul.f32 %v246, %v248
        %v253 = vsub.f32 %v249, %v251
        %v254 = vsub.f32 %v250, %v252
        %v255 = vand.u32 2147483647, %v245
        %v256 = vand.u32 2147483647, %v246
        %v257 = vsub.f32 0.0, %v255
        %v258 = vsub.f32 0.0, %v256
        %v259 = vmul.f32 %v257, 1.442695
        %v260 = vpow.pop %v259
        %v261 = vmul.f32 %v258, 1.442695
        %v262 = vpow.pop %v261
        %v263 = vadd.f32 %v260, 1.0
        %v264 = vlog2.pop %v263
        %v265 = vmul.f32 %v264, 0.6931472
        %v266 = vmul.f32 -0.5, %v260
        %v267 = vadd.f32 %v266, 1.0
        %v268 = vmul.f32 %v267, %v260
        %v269 = vand.u32 2147483647, %v260
        %vm270 = vcmp.lt.f32.partialorder %v269, 0.0004427343
        %v271 = vsel %vm270, %v268, %v265
        %v272 = vadd.f32 %v262, 1.0
        %v273 = vlog2.pop %v272
        %v274 = vmul.f32 %v273, 0.6931472
        %v275 = vmul.f32 -0.5, %v262
        %v276 = vadd.f32 %v275, 1.0
        %v277 = vmul.f32 %v276, %v262
        %v278 = vand.u32 2147483647, %v262
        %vm279 = vcmp.lt.f32.partialorder %v278, 0.0004427343
        %v280 = vsel %vm279, %v277, %v274
        %v281 = vadd.f32 %v253, %v271
        %v282 = vadd.f32 %v254, %v280
        %s283 = sadd.s32 %s26, %s27
        %s284 = sadd.s32 %s283, 1
        %s285 = smul.u32 %s284, 16
        %p286 = scmp.le.s32.totalorder %s285, 16
        // Predicated region
        $region41: #{tpu_custom_call.1} parent=27 // pred_check
          %p287 = pneg %p286
        $region42: #{tpu_custom_call.1} parent=27 // pred_check_branch
          %289 = sbr.rel (%p287) target = $region44
        $region43: #{tpu_custom_call.1} parent=27 // pred_region
          %v290 = vld [vmem:[%s231] sm:$0xff]
          %v291 = vadd.f32 %v281, %v282
          %v292 = vadd.f32 %v290, %v291
          %293 = vst [vmem:[%s231] sm:$0xff] %v292
        $region44: #{tpu_custom_call.1} parent=27 // pred_fallthru
          _
        %p294 = scmp.gt.s32.totalorder %s285, 16
        // Predicated region
        $region45: #{tpu_custom_call.1} parent=27 // pred_check
          %p295 = pneg %p294
        $region46: #{tpu_custom_call.1} parent=27 // pred_check_branch
          %297 = sbr.rel (%p295) target = $region48
        $region47: #{tpu_custom_call.1} parent=27 // pred_region
          %s298 = smul.u32 %s283, 16
          %v299 = vlaneseq
          %v300 = vshrl.u32 %v299, 7
          %v301 = vadd.s32 %v300, 8
          %v302 = vstv %s298
          %v303 = vadd.s32 %v302, %v300
          %v304 = vadd.s32 %v302, %v301
          %vm305 = vcmp.lt.s32.totalorder %v303, 16
          %vm306 = vcmp.lt.s32.totalorder %v304, 16
          %v307 = vsel %vm305, %v281, 0.0
          %v308 = vsel %vm306, %v282, 0.0
          %v309 = vld [vmem:[%s231] sm:$0xff]
          %v310 = vadd.f32 %v307, %v308
          %v311 = vadd.f32 %v309, %v310
          %312 = vst [vmem:[%s231] sm:$0xff] %v311
        $region48: #{tpu_custom_call.1} parent=27 // pred_fallthru
          _
        %s313 = sand.u32 %s106, 1
        %s314 = scalar_lea.sflag [#allocation4], %s313
        %s315 = sand.u32 %s106, 1
        %s316 = smul.addr %s315, 8
        %s317 = scalar_lea.vmem [#allocation7], %s316
        // Predicated region
        $region49: #{tpu_custom_call.1} parent=27 // pred_check
          %p318 = pneg %p116
        $region50: #{tpu_custom_call.1} parent=27 // pred_check_branch
          %320 = sbr.rel (%p318) target = $region52
        $region51: #{tpu_custom_call.1} parent=27 // pred_region
          %s322 = ssub.s32 128, 128
          %323 = vsyncadd %s314, %s322
          %s324 = smul.addr %s26, 128
          %s325 = scalar_lea.hbm %s2, %s324
          %s327 = sshll.u32 %s317, 4
          %s328 = int_to_ptr.vmem [resolvable:$true] %s327
          %330 = dma.vmem_to_hbm [thread:$0]  %s328, 128, %s325, %s314
        $region52: #{tpu_custom_call.1} parent=27 // pred_fallthru
          _
      $region28: #{tpu_custom_call.1} parent=5 // pred_fallthru
        _
      %p331 = scmp.le.s32.totalorder 2, %s17
      // Predicated region
      $region53: #{tpu_custom_call.1} parent=5 // pred_check
        %p332 = pneg %p331
      $region54: #{tpu_custom_call.1} parent=5 // pred_check_branch
        %334 = sbr.rel (%p332) target = $region56
      $region55: #{tpu_custom_call.1} parent=5 // pred_region
        %s335 = ssub.s32 %s17, 2
        // Predicated region
        $region57: #{tpu_custom_call.1} parent=55 // pred_check
          %p336 = pneg %p122
        $region58: #{tpu_custom_call.1} parent=55 // pred_check_branch
          %338 = sbr.rel (%p336) target = $region60
        $region59: #{tpu_custom_call.1} parent=55 // pred_region
          %s339 = sand.u32 %s107, 1
          %s340 = scalar_lea.sflag [#allocation4], %s339
          %s341 = sand.u32 %s107, 1
          %s342 = smul.addr %s341, 8
          %s343 = scalar_lea.vmem [#allocation7], %s342
          %344 = dma.done %s340, 128
        $region60: #{tpu_custom_call.1} parent=55 // pred_fallthru
          _
      $region56: #{tpu_custom_call.1} parent=5 // pred_fallthru
        _
    $region6: #{tpu_custom_call.1} parent=1 // loop_footer
      %s21 = sadd.s32 1, %s17
    $region7: #{tpu_custom_call.1} parent=1 // loop_footer_branch
      %16 = sbr.rel target = $region3
    $region8: #{tpu_custom_call.1} parent=1 // loop_exit
      _
    %345 = vsyncpa [#allocation3], 1
    %s346 = scalar_lea.sflag [#allocation3], 1
    %347 = vsyncpa %s346, 1
    %348 = vsyncpa [#allocation6], 1
    %s349 = scalar_lea.sflag [#allocation6], 1
    %350 = vsyncpa %s349, 1
    %351 = vsyncpa [#allocation4], 1
    %s352 = scalar_lea.sflag [#allocation4], 1
    %353 = vsyncpa %s352, 1

</llo_original>
